<compile_context>
chip_gen: v5e
topology: v5e:2x2
jax: 0.10.0
libtpu: 0.0.40
codegen_flags: <defaults>
</compile_context>

<pallas_src>
import jax
import jax.numpy as jnp
from jax.experimental import pallas as pl
from jax.experimental.pallas import tpu as pltpu


def _round_up(x, m):
    return ((x + m - 1) // m) * m


# ---------------------------------------------------------------------------
# Kernel
# ---------------------------------------------------------------------------
def qnetwork_kernel(xu_ref, w14_ref, b14_ref, w2_ref, b2_ref, w5_ref, b5_ref,
                    w3p_ref, w6p_ref, b36_ref, q_ref):
    # xu: [TB, IN_pad] bf16, weights bf16, biases f32, output f32 [TB, 128].
    xu = xu_ref[...]

    # Fused layer 1: (linear1 || linear4) in one MXU push, f32 accumulate.
    h = jnp.dot(xu, w14_ref[...], preferred_element_type=jnp.float32) + b14_ref[...]
    h = jnp.maximum(h, 0.0)                       # [TB, 2*H_pad]

    hp = w2_ref.shape[0]                          # H_pad (static)
    h1 = h[:, :hp].astype(jnp.bfloat16)           # lane-aligned static slice
    h4 = h[:, hp:].astype(jnp.bfloat16)

    # Layer 2 (per tower), bias + ReLU in f32.
    g1 = jnp.dot(h1, w2_ref[...], preferred_element_type=jnp.float32) + b2_ref[...]
    g1 = jnp.maximum(g1, 0.0).astype(jnp.bfloat16)
    g4 = jnp.dot(h4, w5_ref[...], preferred_element_type=jnp.float32) + b5_ref[...]
    g4 = jnp.maximum(g4, 0.0).astype(jnp.bfloat16)

    # Fused scalar heads: w3p has linear3's column in lane 0, w6p has
    # linear6's column in lane 1 (all other lanes zero) -> one lane-dense
    # [TB, 128] output slab, single unmasked store.
    q = (jnp.dot(g1, w3p_ref[...], preferred_element_type=jnp.float32)
         + jnp.dot(g4, w6p_ref[...], preferred_element_type=jnp.float32)
         + b36_ref[...])
    q_ref[...] = q


# ---------------------------------------------------------------------------
# Parameter preparation: pad to (8,128)-friendly tiles, fuse, cast to bf16.
# Done once per parameter set (outside the hot path).
# ---------------------------------------------------------------------------
def prepare_params(params, num_inputs, num_actions, hidden_dim):
    in_dim = num_inputs + num_actions
    in_pad = _round_up(in_dim, 128)
    h_pad = _round_up(hidden_dim, 128)
    out_pad = 128

    def pad2(a, rows, cols):
        return jnp.pad(a, ((0, rows - a.shape[0]), (0, cols - a.shape[1])))

    # Fused layer-1 weights / biases: [IN_pad, 2*H_pad] bf16, [1, 2*H_pad] f32.
    w14 = jnp.concatenate(
        [pad2(params["w1"], in_pad, h_pad), pad2(params["w4"], in_pad, h_pad)],
        axis=1).astype(jnp.bfloat16)
    b14 = jnp.concatenate(
        [pad2(params["b1"], 1, h_pad), pad2(params["b4"], 1, h_pad)], axis=1)

    w2 = pad2(params["w2"], h_pad, h_pad).astype(jnp.bfloat16)
    b2 = pad2(params["b2"], 1, h_pad)
    w5 = pad2(params["w5"], h_pad, h_pad).astype(jnp.bfloat16)
    b5 = pad2(params["b5"], 1, h_pad)

    # Fused heads: q lane 0 <- linear3, q lane 1 <- linear6.
    w3p = jnp.zeros((h_pad, out_pad), jnp.float32)
    w3p = w3p.at[:hidden_dim, 0:1].set(params["w3"]).astype(jnp.bfloat16)
    w6p = jnp.zeros((h_pad, out_pad), jnp.float32)
    w6p = w6p.at[:hidden_dim, 1:2].set(params["w6"]).astype(jnp.bfloat16)
    b36 = jnp.zeros((1, out_pad), jnp.float32)
    b36 = b36.at[:, 0:1].set(params["b3"]).at[:, 1:2].set(params["b6"])

    return dict(w14=w14, b14=b14, w2=w2, b2=b2, w5=w5, b5=b5,
                w3p=w3p, w6p=w6p, b36=b36,
                in_pad=in_pad, h_pad=h_pad, out_pad=out_pad)


# ---------------------------------------------------------------------------
# Forward wrapper
# ---------------------------------------------------------------------------
def qnetwork_forward(state, action, prepped, *, max_tile_b=128):
    batch = state.shape[0]
    in_pad = prepped["in_pad"]
    h_pad = prepped["h_pad"]
    out_pad = prepped["out_pad"]

    # Batch tile: multiple of 16 (bf16 sublane packing), capped at 128 rows.
    tb = min(max_tile_b, _round_up(max(batch, 1), 16))
    b_pad = _round_up(batch, tb)

    xu = jnp.concatenate([state, action], axis=1)
    xu_p = jnp.pad(xu, ((0, b_pad - batch), (0, in_pad - xu.shape[1])))
    xu_p = xu_p.astype(jnp.bfloat16)

    grid = (b_pad // tb,)

    q = pl.pallas_call(
        qnetwork_kernel,
        out_shape=jax.ShapeDtypeStruct((b_pad, out_pad), jnp.float32),
        grid_spec=pltpu.PrefetchScalarGridSpec(
            num_scalar_prefetch=0,
            grid=grid,
            in_specs=[
                # Batch-tiled input (double-buffered across grid steps).
                pl.BlockSpec((tb, in_pad), lambda i: (i, 0)),
                # Weights / biases: constant block index -> stay VMEM-resident.
                pl.BlockSpec((in_pad, 2 * h_pad), lambda i: (0, 0)),
                pl.BlockSpec((1, 2 * h_pad), lambda i: (0, 0)),
                pl.BlockSpec((h_pad, h_pad), lambda i: (0, 0)),
                pl.BlockSpec((1, h_pad), lambda i: (0, 0)),
                pl.BlockSpec((h_pad, h_pad), lambda i: (0, 0)),
                pl.BlockSpec((1, h_pad), lambda i: (0, 0)),
                pl.BlockSpec((h_pad, out_pad), lambda i: (0, 0)),
                pl.BlockSpec((h_pad, out_pad), lambda i: (0, 0)),
                pl.BlockSpec((1, out_pad), lambda i: (0, 0)),
            ],
            out_specs=pl.BlockSpec((tb, out_pad), lambda i: (i, 0)),
        ),
        compiler_params=pltpu.CompilerParams(
            # Batch tiles are independent -> shards across both TCs on v7x.
            dimension_semantics=("parallel",),
        ),
    )(xu_p, prepped["w14"], prepped["b14"], prepped["w2"], prepped["b2"],
      prepped["w5"], prepped["b5"], prepped["w3p"], prepped["w6p"],
      prepped["b36"])

    q1 = q[:batch, 0:1]
    q2 = q[:batch, 1:2]
    return q1, q2


# ---------------------------------------------------------------------------
# Init (matches torch: xavier_uniform_ weights, zero biases) + references
# ---------------------------------------------------------------------------
def xavier_uniform(key, fan_in, fan_out):
    bound = (6.0 / (fan_in + fan_out)) ** 0.5
    return jax.random.uniform(key, (fan_in, fan_out), jnp.float32, -bound, bound)


def init_params(key, num_inputs, num_actions, hidden_dim, random_bias=False):
    in_dim = num_inputs + num_actions
    keys = jax.random.split(key, 12)

    def bias(k, n):
        if random_bias:  # torch init uses zeros; randomize to exercise bias path
            return jax.random.normal(k, (1, n), jnp.float32) * 0.1
        return jnp.zeros((1, n), jnp.float32)

    return {
        "w1": xavier_uniform(keys[0], in_dim, hidden_dim), "b1": bias(keys[1], hidden_dim),
        "w2": xavier_uniform(keys[2], hidden_dim, hidden_dim), "b2": bias(keys[3], hidden_dim),
        "w3": xavier_uniform(keys[4], hidden_dim, 1), "b3": bias(keys[5], 1),
        "w4": xavier_uniform(keys[6], in_dim, hidden_dim), "b4": bias(keys[7], hidden_dim),
        "w5": xavier_uniform(keys[8], hidden_dim, hidden_dim), "b5": bias(keys[9], hidden_dim),
        "w6": xavier_uniform(keys[10], hidden_dim, 1), "b6": bias(keys[11], 1),
    }


def reference_forward(state, action, p, emulate_bf16=False):
    cast = (lambda x: x.astype(jnp.bfloat16)) if emulate_bf16 else (lambda x: x)

    def lin(x, w, b):
        return jnp.dot(cast(x), cast(w), preferred_element_type=jnp.float32) + b

    xu = jnp.concatenate([state, action], axis=1)
    h = jnp.maximum(lin(xu, p["w1"], p["b1"]), 0.0)
    h = jnp.maximum(lin(h, p["w2"], p["b2"]), 0.0)
    q1 = lin(h, p["w3"], p["b3"])
    g = jnp.maximum(lin(xu, p["w4"], p["b4"]), 0.0)
    g = jnp.maximum(lin(g, p["w5"], p["b5"]), 0.0)
    q2 = lin(g, p["w6"], p["b6"])
    return q1, q2


if __name__ == "__main__":
    batch, num_inputs, num_actions, hidden_dim = 4, 16, 8, 32

    key = jax.random.PRNGKey(0)
    k_state, k_action, k_params = jax.random.split(key, 3)
    state = jax.random.normal(k_state, (batch, num_inputs), jnp.float32)
    action = jax.random.normal(k_action, (batch, num_actions), jnp.float32)
    params = init_params(k_params, num_inputs, num_actions, hidden_dim,
                         random_bias=True)
    prepped = prepare_params(params, num_inputs, num_actions, hidden_dim)

    q1, q2 = jax.block_until_ready(qnetwork_forward(state, action, prepped))

    # Exact-math reference with the same bf16 matmul inputs (tight tolerance)
    r1_bf, r2_bf = reference_forward(state, action, params, emulate_bf16=True)
    # Pure-f32 reference (loose tolerance, validates forward semantics)
    r1_f32, r2_f32 = reference_forward(state, action, params, emulate_bf16=False)

    assert q1.shape == (batch, 1) and q2.shape == (batch, 1)
    assert jnp.allclose(q1, r1_bf, atol=1e-3, rtol=1e-3)
    assert jnp.allclose(q2, r2_bf, atol=1e-3, rtol=1e-3)
    assert jnp.allclose(q1, r1_f32, atol=5e-2, rtol=5e-2)
    assert jnp.allclose(q2, r2_f32, atol=5e-2, rtol=5e-2)

    print("KERNEL_OK")
</pallas_src>

<mosaic_0001>
module attributes {stable_mosaic.version = 11 : i64} {
  func.func @qnetwork_kernel(%arg0: i32, %arg1: memref<16x128xbf16, #tpu.memory_space<vmem>>, %arg2: memref<128x256xbf16, #tpu.memory_space<vmem>>, %arg3: memref<1x256xf32, #tpu.memory_space<vmem>>, %arg4: memref<128x128xbf16, #tpu.memory_space<vmem>>, %arg5: memref<1x128xf32, #tpu.memory_space<vmem>>, %arg6: memref<128x128xbf16, #tpu.memory_space<vmem>>, %arg7: memref<1x128xf32, #tpu.memory_space<vmem>>, %arg8: memref<128x128xbf16, #tpu.memory_space<vmem>>, %arg9: memref<128x128xbf16, #tpu.memory_space<vmem>>, %arg10: memref<1x128xf32, #tpu.memory_space<vmem>>, %arg11: memref<16x128xf32, #tpu.memory_space<vmem>>) attributes {dimension_semantics = [#tpu.dimension_semantics<parallel>], iteration_bounds = array<i64: 1>, scalar_prefetch = 0 : i64, scratch_operands = 0 : i64, tpu.core_type = #tpu.core_type<tc>, window_params = [{transform_indices = @transform_0, window_bounds = array<i64: 16, 128>}, {pipeline_mode = #tpu.pipeline_mode<synchronous>, transform_indices = @transform_1, window_bounds = array<i64: 128, 256>}, {pipeline_mode = #tpu.pipeline_mode<synchronous>, transform_indices = @transform_2, window_bounds = array<i64: 1, 256>}, {pipeline_mode = #tpu.pipeline_mode<synchronous>, transform_indices = @transform_3, window_bounds = array<i64: 128, 128>}, {pipeline_mode = #tpu.pipeline_mode<synchronous>, transform_indices = @transform_4, window_bounds = array<i64: 1, 128>}, {pipeline_mode = #tpu.pipeline_mode<synchronous>, transform_indices = @transform_5, window_bounds = array<i64: 128, 128>}, {pipeline_mode = #tpu.pipeline_mode<synchronous>, transform_indices = @transform_6, window_bounds = array<i64: 1, 128>}, {pipeline_mode = #tpu.pipeline_mode<synchronous>, transform_indices = @transform_7, window_bounds = array<i64: 128, 128>}, {pipeline_mode = #tpu.pipeline_mode<synchronous>, transform_indices = @transform_8, window_bounds = array<i64: 128, 128>}, {pipeline_mode = #tpu.pipeline_mode<synchronous>, transform_indices = @transform_9, window_bounds = array<i64: 1, 128>}, {transform_indices = @transform_10, window_bounds = array<i64: 16, 128>}]} {
    %c0 = arith.constant 0 : index
    %c0_0 = arith.constant 0 : index
    %0 = vector.load %arg1[%c0, %c0_0] : memref<16x128xbf16, #tpu.memory_space<vmem>>, vector<16x128xbf16>
    %c0_1 = arith.constant 0 : index
    %c0_2 = arith.constant 0 : index
    %1 = vector.load %arg2[%c0_1, %c0_2] : memref<128x256xbf16, #tpu.memory_space<vmem>>, vector<128x256xbf16>
    %cst = arith.constant dense<0.000000e+00> : vector<16x256xf32>
    %2 = tpu.matmul %0, %1, %cst {dimension_numbers = #tpu.dot_dimension_numbers<[1], [0], [0], [1], [0, 0, 1, 1], [], []>} : vector<16x128xbf16>, vector<128x256xbf16>, vector<16x256xf32> -> vector<16x256xf32>
    %c0_3 = arith.constant 0 : index
    %c0_4 = arith.constant 0 : index
    %3 = vector.load %arg3[%c0_3, %c0_4] : memref<1x256xf32, #tpu.memory_space<vmem>>, vector<1x256xf32>
    %4 = vector.broadcast %3 : vector<1x256xf32> to vector<16x256xf32>
    %5 = arith.addf %2, %4 : vector<16x256xf32>
    %cst_5 = arith.constant 0.000000e+00 : f32
    %6 = vector.broadcast %cst_5 : f32 to vector<16x256xf32>
    %7 = arith.maximumf %5, %6 : vector<16x256xf32>
    %8 = vector.extract_strided_slice %7 {offsets = [0, 0], sizes = [16, 128], strides = [1, 1]} : vector<16x256xf32> to vector<16x128xf32>
    %9 = arith.truncf %8 : vector<16x128xf32> to vector<16x128xbf16>
    %10 = vector.extract_strided_slice %7 {offsets = [0, 128], sizes = [16, 128], strides = [1, 1]} : vector<16x256xf32> to vector<16x128xf32>
    %11 = arith.truncf %10 : vector<16x128xf32> to vector<16x128xbf16>
    %c0_6 = arith.constant 0 : index
    %c0_7 = arith.constant 0 : index
    %12 = vector.load %arg4[%c0_6, %c0_7] : memref<128x128xbf16, #tpu.memory_space<vmem>>, vector<128x128xbf16>
    %cst_8 = arith.constant dense<0.000000e+00> : vector<16x128xf32>
    %13 = tpu.matmul %9, %12, %cst_8 {dimension_numbers = #tpu.dot_dimension_numbers<[1], [0], [0], [1], [0, 0, 1, 1], [], []>} : vector<16x128xbf16>, vector<128x128xbf16>, vector<16x128xf32> -> vector<16x128xf32>
    %c0_9 = arith.constant 0 : index
    %c0_10 = arith.constant 0 : index
    %14 = vector.load %arg5[%c0_9, %c0_10] : memref<1x128xf32, #tpu.memory_space<vmem>>, vector<1x128xf32>
    %15 = vector.broadcast %14 : vector<1x128xf32> to vector<16x128xf32>
    %16 = arith.addf %13, %15 : vector<16x128xf32>
    %cst_11 = arith.constant 0.000000e+00 : f32
    %17 = vector.broadcast %cst_11 : f32 to vector<16x128xf32>
    %18 = arith.maximumf %16, %17 : vector<16x128xf32>
    %19 = arith.truncf %18 : vector<16x128xf32> to vector<16x128xbf16>
    %c0_12 = arith.constant 0 : index
    %c0_13 = arith.constant 0 : index
    %20 = vector.load %arg6[%c0_12, %c0_13] : memref<128x128xbf16, #tpu.memory_space<vmem>>, vector<128x128xbf16>
    %cst_14 = arith.constant dense<0.000000e+00> : vector<16x128xf32>
    %21 = tpu.matmul %11, %20, %cst_14 {dimension_numbers = #tpu.dot_dimension_numbers<[1], [0], [0], [1], [0, 0, 1, 1], [], []>} : vector<16x128xbf16>, vector<128x128xbf16>, vector<16x128xf32> -> vector<16x128xf32>
    %c0_15 = arith.constant 0 : index
    %c0_16 = arith.constant 0 : index
    %22 = vector.load %arg7[%c0_15, %c0_16] : memref<1x128xf32, #tpu.memory_space<vmem>>, vector<1x128xf32>
    %23 = vector.broadcast %22 : vector<1x128xf32> to vector<16x128xf32>
    %24 = arith.addf %21, %23 : vector<16x128xf32>
    %cst_17 = arith.constant 0.000000e+00 : f32
    %25 = vector.broadcast %cst_17 : f32 to vector<16x128xf32>
    %26 = arith.maximumf %24, %25 : vector<16x128xf32>
    %27 = arith.truncf %26 : vector<16x128xf32> to vector<16x128xbf16>
    %c0_18 = arith.constant 0 : index
    %c0_19 = arith.constant 0 : index
    %28 = vector.load %arg8[%c0_18, %c0_19] : memref<128x128xbf16, #tpu.memory_space<vmem>>, vector<128x128xbf16>
    %cst_20 = arith.constant dense<0.000000e+00> : vector<16x128xf32>
    %29 = tpu.matmul %19, %28, %cst_20 {dimension_numbers = #tpu.dot_dimension_numbers<[1], [0], [0], [1], [0, 0, 1, 1], [], []>} : vector<16x128xbf16>, vector<128x128xbf16>, vector<16x128xf32> -> vector<16x128xf32>
    %c0_21 = arith.constant 0 : index
    %c0_22 = arith.constant 0 : index
    %30 = vector.load %arg9[%c0_21, %c0_22] : memref<128x128xbf16, #tpu.memory_space<vmem>>, vector<128x128xbf16>
    %cst_23 = arith.constant dense<0.000000e+00> : vector<16x128xf32>
    %31 = tpu.matmul %27, %30, %cst_23 {dimension_numbers = #tpu.dot_dimension_numbers<[1], [0], [0], [1], [0, 0, 1, 1], [], []>} : vector<16x128xbf16>, vector<128x128xbf16>, vector<16x128xf32> -> vector<16x128xf32>
    %32 = arith.addf %29, %31 : vector<16x128xf32>
    %c0_24 = arith.constant 0 : index
    %c0_25 = arith.constant 0 : index
    %33 = vector.load %arg10[%c0_24, %c0_25] : memref<1x128xf32, #tpu.memory_space<vmem>>, vector<1x128xf32>
    %34 = vector.broadcast %33 : vector<1x128xf32> to vector<16x128xf32>
    %35 = arith.addf %32, %34 : vector<16x128xf32>
    %c0_26 = arith.constant 0 : index
    %c0_27 = arith.constant 0 : index
    %36 = vector.load %arg11[%c0_26, %c0_27] : memref<16x128xf32, #tpu.memory_space<vmem>>, vector<16x128xf32>
    tpu.vector_store %arg11[%c0_26, %c0_27], %35 {strides = array<i32>} : memref<16x128xf32, #tpu.memory_space<vmem>>, vector<16x128xf32>,
    return
  }
  func.func @transform_0(%arg0: i32) -> (i32, i32) {
    %c0_i32 = arith.constant 0 : i32
    %c0_i32_0 = arith.constant 0 : i32
    return %arg0, %c0_i32 : i32, i32
  }
  func.func @transform_1(%arg0: i32) -> (i32, i32) {
    %c0_i32 = arith.constant 0 : i32
    %c0_i32_0 = arith.constant 0 : i32
    %c0_i32_1 = arith.constant 0 : i32
    return %c0_i32, %c0_i32_0 : i32, i32
  }
  func.func @transform_2(%arg0: i32) -> (i32, i32) {
    %c0_i32 = arith.constant 0 : i32
    %c0_i32_0 = arith.constant 0 : i32
    %c0_i32_1 = arith.constant 0 : i32
    return %c0_i32, %c0_i32_0 : i32, i32
  }
  func.func @transform_3(%arg0: i32) -> (i32, i32) {
    %c0_i32 = arith.constant 0 : i32
    %c0_i32_0 = arith.constant 0 : i32
    %c0_i32_1 = arith.constant 0 : i32
    return %c0_i32, %c0_i32_0 : i32, i32
  }
  func.func @transform_4(%arg0: i32) -> (i32, i32) {
    %c0_i32 = arith.constant 0 : i32
    %c0_i32_0 = arith.constant 0 : i32
    %c0_i32_1 = arith.constant 0 : i32
    return %c0_i32, %c0_i32_0 : i32, i32
  }
  func.func @transform_5(%arg0: i32) -> (i32, i32) {
    %c0_i32 = arith.constant 0 : i32
    %c0_i32_0 = arith.constant 0 : i32
    %c0_i32_1 = arith.constant 0 : i32
    return %c0_i32, %c0_i32_0 : i32, i32
  }
  func.func @transform_6(%arg0: i32) -> (i32, i32) {
    %c0_i32 = arith.constant 0 : i32
    %c0_i32_0 = arith.constant 0 : i32
    %c0_i32_1 = arith.constant 0 : i32
    return %c0_i32, %c0_i32_0 : i32, i32
  }
  func.func @transform_7(%arg0: i32) -> (i32, i32) {
    %c0_i32 = arith.constant 0 : i32
    %c0_i32_0 = arith.constant 0 : i32
    %c0_i32_1 = arith.constant 0 : i32
    return %c0_i32, %c0_i32_0 : i32, i32
  }
  func.func @transform_8(%arg0: i32) -> (i32, i32) {
    %c0_i32 = arith.constant 0 : i32
    %c0_i32_0 = arith.constant 0 : i32
    %c0_i32_1 = arith.constant 0 : i32
    return %c0_i32, %c0_i32_0 : i32, i32
  }
  func.func @transform_9(%arg0: i32) -> (i32, i32) {
    %c0_i32 = arith.constant 0 : i32
    %c0_i32_0 = arith.constant 0 : i32
    %c0_i32_1 = arith.constant 0 : i32
    return %c0_i32, %c0_i32_0 : i32, i32
  }
  func.func @transform_10(%arg0: i32) -> (i32, i32) {
    %c0_i32 = arith.constant 0 : i32
    %c0_i32_0 = arith.constant 0 : i32
    return %arg0, %c0_i32 : i32, i32
  }
}

</mosaic_0001>

<llo_original>
// kernel: tpu_custom_call.1
$region0: #{tpu_custom_call.1}
  #allocation0 [shape = 'u32[]', space=smem, size = 0x4, offset = 0x4, fixed_abs, tag = 'smem constant byte address 0x4 - core index']
  #allocation1 [shape = 'u32[72,128]{1,0:T(1,128)}', space=vmem, size = 0x9000, scoped, tag = 'internal scratch']
  %s0 = inlined_call_operand.hbm [shape: bf16[16,128], index: 0, kind: input, shape index: {}]
  %s1 = inlined_call_operand.hbm [shape: bf16[128,256], index: 1, kind: input, shape index: {}]
  %s2 = inlined_call_operand.hbm [shape: f32[1,256], index: 2, kind: input, shape index: {}]
  %s3 = inlined_call_operand.hbm [shape: bf16[128,128], index: 3, kind: input, shape index: {}]
  %s4 = inlined_call_operand.vmem [shape: f32[1,128], index: 4, kind: input, shape index: {}]
  %s5 = inlined_call_operand.hbm [shape: bf16[128,128], index: 5, kind: input, shape index: {}]
  %s6 = inlined_call_operand.vmem [shape: f32[1,128], index: 6, kind: input, shape index: {}]
  %s7 = inlined_call_operand.hbm [shape: bf16[128,128], index: 7, kind: input, shape index: {}]
  %s8 = inlined_call_operand.hbm [shape: bf16[128,128], index: 8, kind: input, shape index: {}]
  %s9 = inlined_call_operand.vmem [shape: f32[1,128], index: 9, kind: input, shape index: {}]
  %s10 = inlined_call_operand.hbm [shape: f32[16,128], index: 10, kind: output, shape index: {}]
  %s11 = sld [smem:[#allocation0]]
  $region78: #{tpu_custom_call.1} parent=0
    _
  %s13 = ssub.s32 1, %s11
  %s14 = scalar_select 0, %s13, %s11
  $region1: #{tpu_custom_call.1} parent=0
    #allocation2 [shape = 'u8[4096]{0}', space=vmem, size = 0x1000, scoped, tag = 'input window, operand 0, single buffered']
    #allocation3 [shape = 's32[1]{0}', space=sflag, size = 0x4, scoped, tag = 'scoped memory for tpu_custom_call.1']
    #allocation4 [shape = 's32[1]{0}', space=sflag, size = 0x4, scoped, tag = 'scoped memory for tpu_custom_call.1']
    #allocation5 [shape = 'u8[65536]{0}', space=vmem, size = 0x10000, scoped, tag = 'input window, operand 1, single buffered']
    #allocation6 [shape = 's32[1]{0}', space=sflag, size = 0x4, scoped, tag = 'scoped memory for tpu_custom_call.1']
    #allocation7 [shape = 'u8[1024]{0}', space=vmem, size = 0x400, scoped, tag = 'input window, operand 2, single buffered']
    #allocation8 [shape = 'u8[32768]{0}', space=vmem, size = 0x8000, scoped, tag = 'input window, operand 3, single buffered']
    #allocation9 [shape = 's32[1]{0}', space=sflag, size = 0x4, scoped, tag = 'scoped memory for tpu_custom_call.1']
    #allocation10 [shape = 'u8[32768]{0}', space=vmem, size = 0x8000, scoped, tag = 'input window, operand 5, single buffered']
    #allocation11 [shape = 'u8[32768]{0}', space=vmem, size = 0x8000, scoped, tag = 'input window, operand 7, single buffered']
    #allocation12 [shape = 's32[1]{0}', space=sflag, size = 0x4, scoped, tag = 'scoped memory for tpu_custom_call.1']
    #allocation13 [shape = 'u8[32768]{0}', space=vmem, size = 0x8000, scoped, tag = 'input window, operand 8, single buffered']
    #allocation14 [shape = 'u8[8192]{0}', space=vmem, size = 0x2000, scoped, tag = 'output window, operand 0, single buffered']
    %15 = vsyncpa [#allocation3], 0
    %16 = vsyncpa [#allocation6], 0
    %17 = vsyncpa [#allocation9], 0
    %18 = vsyncpa [#allocation12], 0
    %19 = vsyncpa [#allocation4], 0
    // Predicated region
    $region2: #{tpu_custom_call.1} parent=1 // pred_check
      _
    $region3: #{tpu_custom_call.1} parent=1 // pred_check_branch
      %21 = sbr.rel (0) target = $region5
    $region4: #{tpu_custom_call.1} parent=1 // pred_region
      %23 = vsyncadd [#allocation3], 0
      %s24 = sshll.u32 %s0, 4
      %s25 = int_to_ptr.hbm [resolvable:$true] %s24
      %s26 = sshll.u32 [#allocation2], 4
      %s27 = int_to_ptr.vmem [resolvable:$true] %s26
      %32 = dma.hbm_to_vmem [thread:$0]  %s25, 128, %s27, [#allocation3], 64, 64, 4
    $region5: #{tpu_custom_call.1} parent=1 // pred_fallthru
      _
    // Predicated region
    $region6: #{tpu_custom_call.1} parent=1 // pred_check
      _
    $region7: #{tpu_custom_call.1} parent=1 // pred_check_branch
      %34 = sbr.rel (0) target = $region9
    $region8: #{tpu_custom_call.1} parent=1 // pred_region
      %36 = vsyncadd [#allocation6], 0
      %s37 = sshll.u32 %s1, 4
      %s38 = int_to_ptr.hbm [resolvable:$true] %s37
      %s39 = sshll.u32 [#allocation5], 4
      %s40 = int_to_ptr.vmem [resolvable:$true] %s39
      %45 = dma.hbm_to_vmem [thread:$0]  %s38, 2048, %s40, [#allocation6], 128, 128, 8
    $region9: #{tpu_custom_call.1} parent=1 // pred_fallthru
      _
    // Predicated region
    $region10: #{tpu_custom_call.1} parent=1 // pred_check
      _
    $region11: #{tpu_custom_call.1} parent=1 // pred_check_branch
      %47 = sbr.rel (0) target = $region13
    $region12: #{tpu_custom_call.1} parent=1 // pred_region
      %49 = vsyncadd [#allocation6], 0
      %s51 = sshll.u32 %s2, 4
      %s52 = int_to_ptr.hbm [resolvable:$true] %s51
      %s53 = sshll.u32 [#allocation7], 4
      %s54 = int_to_ptr.vmem [resolvable:$true] %s53
      %56 = dma.hbm_to_vmem [thread:$0]  %s52, 32, %s54, [#allocation6]
    $region13: #{tpu_custom_call.1} parent=1 // pred_fallthru
      _
    // Predicated region
    $region14: #{tpu_custom_call.1} parent=1 // pred_check
      _
    $region15: #{tpu_custom_call.1} parent=1 // pred_check_branch
      %58 = sbr.rel (0) target = $region17
    $region16: #{tpu_custom_call.1} parent=1 // pred_region
      %60 = vsyncadd [#allocation9], 0
      %s61 = sshll.u32 %s3, 4
      %s62 = int_to_ptr.hbm [resolvable:$true] %s61
      %s63 = sshll.u32 [#allocation8], 4
      %s64 = int_to_ptr.vmem [resolvable:$true] %s63
      %69 = dma.hbm_to_vmem [thread:$0]  %s62, 1024, %s64, [#allocation9], 64, 64, 4
    $region17: #{tpu_custom_call.1} parent=1 // pred_fallthru
      _
    // Predicated region
    $region18: #{tpu_custom_call.1} parent=1 // pred_check
      _
    $region19: #{tpu_custom_call.1} parent=1 // pred_check_branch
      %71 = sbr.rel (0) target = $region21
    $region20: #{tpu_custom_call.1} parent=1 // pred_region
      _
    $region21: #{tpu_custom_call.1} parent=1 // pred_fallthru
      _
    // Predicated region
    $region22: #{tpu_custom_call.1} parent=1 // pred_check
      _
    $region23: #{tpu_custom_call.1} parent=1 // pred_check_branch
      %73 = sbr.rel (0) target = $region25
    $region24: #{tpu_custom_call.1} parent=1 // pred_region
      %75 = vsyncadd [#allocation9], 0
      %s76 = sshll.u32 %s5, 4
      %s77 = int_to_ptr.hbm [resolvable:$true] %s76
      %s78 = sshll.u32 [#allocation10], 4
      %s79 = int_to_ptr.vmem [resolvable:$true] %s78
      %84 = dma.hbm_to_vmem [thread:$0]  %s77, 1024, %s79, [#allocation9], 64, 64, 4
    $region25: #{tpu_custom_call.1} parent=1 // pred_fallthru
      _
    // Predicated region
    $region26: #{tpu_custom_call.1} parent=1 // pred_check
      _
    $region27: #{tpu_custom_call.1} parent=1 // pred_check_branch
      %86 = sbr.rel (0) target = $region29
    $region28: #{tpu_custom_call.1} parent=1 // pred_region
      _
    $region29: #{tpu_custom_call.1} parent=1 // pred_fallthru
      _
    // Predicated region
    $region30: #{tpu_custom_call.1} parent=1 // pred_check
      _
    $region31: #{tpu_custom_call.1} parent=1 // pred_check_branch
      %88 = sbr.rel (0) target = $region33
    $region32: #{tpu_custom_call.1} parent=1 // pred_region
      %90 = vsyncadd [#allocation12], 0
      %s91 = sshll.u32 %s7, 4
      %s92 = int_to_ptr.hbm [resolvable:$true] %s91
      %s93 = sshll.u32 [#allocation11], 4
      %s94 = int_to_ptr.vmem [resolvable:$true] %s93
      %99 = dma.hbm_to_vmem [thread:$0]  %s92, 1024, %s94, [#allocation12], 64, 64, 4
    $region33: #{tpu_custom_call.1} parent=1 // pred_fallthru
      _
    // Predicated region
    $region34: #{tpu_custom_call.1} parent=1 // pred_check
      _
    $region35: #{tpu_custom_call.1} parent=1 // pred_check_branch
      %101 = sbr.rel (0) target = $region37
    $region36: #{tpu_custom_call.1} parent=1 // pred_region
      %103 = vsyncadd [#allocation12], 0
      %s104 = sshll.u32 %s8, 4
      %s105 = int_to_ptr.hbm [resolvable:$true] %s104
      %s106 = sshll.u32 [#allocation13], 4
      %s107 = int_to_ptr.vmem [resolvable:$true] %s106
      %112 = dma.hbm_to_vmem [thread:$0]  %s105, 1024, %s107, [#allocation12], 64, 64, 4
    $region37: #{tpu_custom_call.1} parent=1 // pred_fallthru
      _
    // Predicated region
    $region38: #{tpu_custom_call.1} parent=1 // pred_check
      _
    $region39: #{tpu_custom_call.1} parent=1 // pred_check_branch
      %114 = sbr.rel (0) target = $region41
    $region40: #{tpu_custom_call.1} parent=1 // pred_region
      _
    $region41: #{tpu_custom_call.1} parent=1 // pred_fallthru
      _
    // Predicated region
    $region42: #{tpu_custom_call.1} parent=1 // pred_check
      _
    $region43: #{tpu_custom_call.1} parent=1 // pred_check_branch
      %116 = sbr.rel (0) target = $region45
    $region44: #{tpu_custom_call.1} parent=1 // pred_region
      %118 = dma.done [#allocation3], 128
    $region45: #{tpu_custom_call.1} parent=1 // pred_fallthru
      _
    // Predicated region
    $region46: #{tpu_custom_call.1} parent=1 // pred_check
      _
    $region47: #{tpu_custom_call.1} parent=1 // pred_check_branch
      %120 = sbr.rel (0) target = $region49
    $region48: #{tpu_custom_call.1} parent=1 // pred_region
      %122 = dma.done [#allocation6], 2048
    $region49: #{tpu_custom_call.1} parent=1 // pred_fallthru
      _
    // Predicated region
    $region50: #{tpu_custom_call.1} parent=1 // pred_check
      _
    $region51: #{tpu_custom_call.1} parent=1 // pred_check_branch
      %124 = sbr.rel (0) target = $region53
    $region52: #{tpu_custom_call.1} parent=1 // pred_region
      %126 = dma.done [#allocation6], 32
    $region53: #{tpu_custom_call.1} parent=1 // pred_fallthru
      _
    // Predicated region
    $region54: #{tpu_custom_call.1} parent=1 // pred_check
      _
    $region55: #{tpu_custom_call.1} parent=1 // pred_check_branch
      %128 = sbr.rel (0) target = $region57
    $region56: #{tpu_custom_call.1} parent=1 // pred_region
      %130 = dma.done [#allocation9], 1024
    $region57: #{tpu_custom_call.1} parent=1 // pred_fallthru
      _
    // Predicated region
    $region58: #{tpu_custom_call.1} parent=1 // pred_check
      _
    $region59: #{tpu_custom_call.1} parent=1 // pred_check_branch
      %132 = sbr.rel (0) target = $region61
    $region60: #{tpu_custom_call.1} parent=1 // pred_region
      %134 = dma.done [#allocation9], 1024
    $region61: #{tpu_custom_call.1} parent=1 // pred_fallthru
      _
    // Predicated region
    $region62: #{tpu_custom_call.1} parent=1 // pred_check
      _
    $region63: #{tpu_custom_call.1} parent=1 // pred_check_branch
      %136 = sbr.rel (0) target = $region65
    $region64: #{tpu_custom_call.1} parent=1 // pred_region
      %138 = dma.done [#allocation12], 1024
    $region65: #{tpu_custom_call.1} parent=1 // pred_fallthru
      _
    // Predicated region
    $region66: #{tpu_custom_call.1} parent=1 // pred_check
      _
    $region67: #{tpu_custom_call.1} parent=1 // pred_check_branch
      %140 = sbr.rel (0) target = $region69
    $region68: #{tpu_custom_call.1} parent=1 // pred_region
      %142 = dma.done [#allocation12], 1024
    $region69: #{tpu_custom_call.1} parent=1 // pred_fallthru
      _
    %v143 = vld [vmem:[#allocation2] sm:$0xf]
    %v144 = vld [vmem:[#allocation2 + $0x4] sm:$0xf]
    %v145 = vld [vmem:[#allocation5] sm:$0xff]
    %v146 = vld [vmem:[#allocation5 + $0x8] sm:$0xff]
    %v147 = vld [vmem:[#allocation5 + $0x10] sm:$0xff]
    %v148 = vld [vmem:[#allocation5 + $0x18] sm:$0xff]
    %v149 = vld [vmem:[#allocation5 + $0x20] sm:$0xff]
    %v150 = vld [vmem:[#allocation5 + $0x28] sm:$0xff]
    %v151 = vld [vmem:[#allocation5 + $0x30] sm:$0xff]
    %v152 = vld [vmem:[#allocation5 + $0x38] sm:$0xff]
    %v153 = vld [vmem:[#allocation5 + $0x40] sm:$0xff]
    %v154 = vld [vmem:[#allocation5 + $0x48] sm:$0xff]
    %v155 = vld [vmem:[#allocation5 + $0x50] sm:$0xff]
    %v156 = vld [vmem:[#allocation5 + $0x58] sm:$0xff]
    %v157 = vld [vmem:[#allocation5 + $0x60] sm:$0xff]
    %v158 = vld [vmem:[#allocation5 + $0x68] sm:$0xff]
    %v159 = vld [vmem:[#allocation5 + $0x70] sm:$0xff]
    %v160 = vld [vmem:[#allocation5 + $0x78] sm:$0xff]
    %v161 = vld [vmem:[#allocation7] sm:$0x3]
    %v163 = vperm.slane %v161, 0
    %v164 = vperm.slane %v161, 1
    %v169 = vunpack.c.l.b16 %v143
    %v170 = vunpack.c.l.b16 %v144
    %v171 = vpack.c.b16 %v170, %v169
    %v189 = vunpack.c.l.b16 %v145
    %v190 = vunpack.c.h.b16 %v145
    %v191 = vunpack.c.l.b16 %v146
    %v192 = vunpack.c.h.b16 %v146
    %v193 = vunpack.c.l.b16 %v147
    %v194 = vunpack.c.h.b16 %v147
    %v195 = vunpack.c.l.b16 %v148
    %v196 = vunpack.c.h.b16 %v148
    %v197 = vunpack.c.l.b16 %v149
    %v198 = vunpack.c.h.b16 %v149
    %v199 = vunpack.c.l.b16 %v150
    %v200 = vunpack.c.h.b16 %v150
    %v201 = vunpack.c.l.b16 %v151
    %v202 = vunpack.c.h.b16 %v151
    %v203 = vunpack.c.l.b16 %v152
    %v204 = vunpack.c.h.b16 %v152
    %v205 = vunpack.c.l.b16 %v153
    %v206 = vunpack.c.h.b16 %v153
    %v207 = vunpack.c.l.b16 %v154
    %v208 = vunpack.c.h.b16 %v154
    %v209 = vunpack.c.l.b16 %v155
    %v210 = vunpack.c.h.b16 %v155
    %v211 = vunpack.c.l.b16 %v156
    %v212 = vunpack.c.h.b16 %v156
    %v213 = vunpack.c.l.b16 %v157
    %v214 = vunpack.c.h.b16 %v157
    %v215 = vunpack.c.l.b16 %v158
    %v216 = vunpack.c.h.b16 %v158
    %v217 = vunpack.c.l.b16 %v159
    %v218 = vunpack.c.h.b16 %v159
    %v219 = vunpack.c.l.b16 %v160
    %v220 = vunpack.c.h.b16 %v160
    %v221 = vpack.c.b16 %v191, %v189
    %v222 = vpack.c.b16 %v192, %v190
    %v223 = vpack.c.b16 %v195, %v193
    %v224 = vpack.c.b16 %v196, %v194
    %v225 = vpack.c.b16 %v199, %v197
    %v226 = vpack.c.b16 %v200, %v198
    %v227 = vpack.c.b16 %v203, %v201
    %v228 = vpack.c.b16 %v204, %v202
    %v229 = vpack.c.b16 %v207, %v205
    %v230 = vpack.c.b16 %v208, %v206
    %v231 = vpack.c.b16 %v211, %v209
    %v232 = vpack.c.b16 %v212, %v210
    %v233 = vpack.c.b16 %v215, %v213
    %v234 = vpack.c.b16 %v216, %v214
    %v235 = vpack.c.b16 %v219, %v217
    %v236 = vpack.c.b16 %v220, %v218
    %253 = vmatpush.bf16.msra.mxu0 %v235
    %254 = vmatpush.bf16.msra.mxu0 %v233
    %255 = vmatpush.bf16.msra.mxu0 %v231
    %256 = vmatpush.bf16.msra.mxu0 %v229
    %257 = vmatpush.bf16.msra.mxu0 %v227
    %258 = vmatpush.bf16.msra.mxu0 %v225
    %259 = vmatpush.bf16.msra.mxu0 %v223
    %260 = vmatpush.bf16.msra.mxu0 %v221
    %261 = vmatmul.bf16.gmra.mxu0 %v171
    %v262 = vpop.f32.mrf.mxu0
    %v263 = vadd.f32 %v163, %v262
    %v264 = vpop.f32.mrf.mxu0
    %v265 = vadd.f32 %v163, %v264
    %266 = vdwg.mxu0
    %267 = vmatpush.bf16.msra.mxu0 %v236
    %268 = vmatpush.bf16.msra.mxu0 %v234
    %269 = vmatpush.bf16.msra.mxu0 %v232
    %270 = vmatpush.bf16.msra.mxu0 %v230
    %271 = vmatpush.bf16.msra.mxu0 %v228
    %272 = vmatpush.bf16.msra.mxu0 %v226
    %273 = vmatpush.bf16.msra.mxu0 %v224
    %274 = vmatpush.bf16.msra.mxu0 %v222
    %275 = vmatmul.bf16.gmra.mxu0 %v171
    %v276 = vpop.f32.mrf.mxu0
    %v277 = vadd.f32 %v164, %v276
    %v278 = vpop.f32.mrf.mxu0
    %v279 = vadd.f32 %v164, %v278
    %280 = vdwg.mxu0
    %v281 = vmax.f32 %v263, 0.0
    %v282 = vmax.f32 %v277, 0.0
    %v283 = vmax.f32 %v265, 0.0
    %v284 = vmax.f32 %v279, 0.0
    %v285 = vpack.c.bf16 %v283, %v281
    %v286 = vpack.c.bf16 %v284, %v282
    %v287 = vld [vmem:[#allocation8] sm:$0xf]
    %v288 = vld [vmem:[#allocation8 + $0x4] sm:$0xf]
    %v289 = vld [vmem:[#allocation8 + $0x8] sm:$0xf]
    %v290 = vld [vmem:[#allocation8 + $0xc] sm:$0xf]
    %v291 = vld [vmem:[#allocation8 + $0x10] sm:$0xf]
    %v292 = vld [vmem:[#allocation8 + $0x14] sm:$0xf]
    %v293 = vld [vmem:[#allocation8 + $0x18] sm:$0xf]
    %v294 = vld [vmem:[#allocation8 + $0x1c] sm:$0xf]
    %v295 = vld [vmem:[#allocation8 + $0x20] sm:$0xf]
    %v296 = vld [vmem:[#allocation8 + $0x24] sm:$0xf]
    %v297 = vld [vmem:[#allocation8 + $0x28] sm:$0xf]
    %v298 = vld [vmem:[#allocation8 + $0x2c] sm:$0xf]
    %v299 = vld [vmem:[#allocation8 + $0x30] sm:$0xf]
    %v300 = vld [vmem:[#allocation8 + $0x34] sm:$0xf]
    %v301 = vld [vmem:[#allocation8 + $0x38] sm:$0xf]
    %v302 = vld [vmem:[#allocation8 + $0x3c] sm:$0xf]
    %v303 = vld [vmem:[%s4] sm:$0x1]
    %v305 = vperm.slane %v303, 0
    %v323 = vunpack.c.l.b16 %v287
    %v324 = vunpack.c.l.b16 %v288
    %v325 = vunpack.c.l.b16 %v289
    %v326 = vunpack.c.l.b16 %v290
    %v327 = vunpack.c.l.b16 %v291
    %v328 = vunpack.c.l.b16 %v292
    %v329 = vunpack.c.l.b16 %v293
    %v330 = vunpack.c.l.b16 %v294
    %v331 = vunpack.c.l.b16 %v295
    %v332 = vunpack.c.l.b16 %v296
    %v333 = vunpack.c.l.b16 %v297
    %v334 = vunpack.c.l.b16 %v298
    %v335 = vunpack.c.l.b16 %v299
    %v336 = vunpack.c.l.b16 %v300
    %v337 = vunpack.c.l.b16 %v301
    %v338 = vunpack.c.l.b16 %v302
    %v339 = vpack.c.b16 %v324, %v323
    %v340 = vpack.c.b16 %v326, %v325
    %v341 = vpack.c.b16 %v328, %v327
    %v342 = vpack.c.b16 %v330, %v329
    %v343 = vpack.c.b16 %v332, %v331
    %v344 = vpack.c.b16 %v334, %v333
    %v345 = vpack.c.b16 %v336, %v335
    %v346 = vpack.c.b16 %v338, %v337
    %355 = vmatpush.bf16.msra.mxu0 %v346
    %356 = vmatpush.bf16.msra.mxu0 %v345
    %357 = vmatpush.bf16.msra.mxu0 %v344
    %358 = vmatpush.bf16.msra.mxu0 %v343
    %359 = vmatpush.bf16.msra.mxu0 %v342
    %360 = vmatpush.bf16.msra.mxu0 %v341
    %361 = vmatpush.bf16.msra.mxu0 %v340
    %362 = vmatpush.bf16.msra.mxu0 %v339
    %363 = vmatmul.bf16.gmra.mxu0 %v285
    %v364 = vpop.f32.mrf.mxu0
    %v365 = vadd.f32 %v305, %v364
    %v366 = vpop.f32.mrf.mxu0
    %v367 = vadd.f32 %v305, %v366
    %368 = vdwg.mxu0
    %v369 = vmax.f32 %v365, 0.0
    %v370 = vmax.f32 %v367, 0.0
    %v371 = vpack.c.bf16 %v370, %v369
    %v372 = vld [vmem:[#allocation10] sm:$0xf]
    %v373 = vld [vmem:[#allocation10 + $0x4] sm:$0xf]
    %v374 = vld [vmem:[#allocation10 + $0x8] sm:$0xf]
    %v375 = vld [vmem:[#allocation10 + $0xc] sm:$0xf]
    %v376 = vld [vmem:[#allocation10 + $0x10] sm:$0xf]
    %v377 = vld [vmem:[#allocation10 + $0x14] sm:$0xf]
    %v378 = vld [vmem:[#allocation10 + $0x18] sm:$0xf]
    %v379 = vld [vmem:[#allocation10 + $0x1c] sm:$0xf]
    %v380 = vld [vmem:[#allocation10 + $0x20] sm:$0xf]
    %v381 = vld [vmem:[#allocation10 + $0x24] sm:$0xf]
    %v382 = vld [vmem:[#allocation10 + $0x28] sm:$0xf]
    %v383 = vld [vmem:[#allocation10 + $0x2c] sm:$0xf]
    %v384 = vld [vmem:[#allocation10 + $0x30] sm:$0xf]
    %v385 = vld [vmem:[#allocation10 + $0x34] sm:$0xf]
    %v386 = vld [vmem:[#allocation10 + $0x38] sm:$0xf]
    %v387 = vld [vmem:[#allocation10 + $0x3c] sm:$0xf]
    %v388 = vld [vmem:[%s6] sm:$0x1]
    %v390 = vperm.slane %v388, 0
    %v408 = vunpack.c.l.b16 %v372
    %v409 = vunpack.c.l.b16 %v373
    %v410 = vunpack.c.l.b16 %v374
    %v411 = vunpack.c.l.b16 %v375
    %v412 = vunpack.c.l.b16 %v376
    %v413 = vunpack.c.l.b16 %v377
    %v414 = vunpack.c.l.b16 %v378
    %v415 = vunpack.c.l.b16 %v379
    %v416 = vunpack.c.l.b16 %v380
    %v417 = vunpack.c.l.b16 %v381
    %v418 = vunpack.c.l.b16 %v382
    %v419 = vunpack.c.l.b16 %v383
    %v420 = vunpack.c.l.b16 %v384
    %v421 = vunpack.c.l.b16 %v385
    %v422 = vunpack.c.l.b16 %v386
    %v423 = vunpack.c.l.b16 %v387
    %v424 = vpack.c.b16 %v409, %v408
    %v425 = vpack.c.b16 %v411, %v410
    %v426 = vpack.c.b16 %v413, %v412
    %v427 = vpack.c.b16 %v415, %v414
    %v428 = vpack.c.b16 %v417, %v416
    %v429 = vpack.c.b16 %v419, %v418
    %v430 = vpack.c.b16 %v421, %v420
    %v431 = vpack.c.b16 %v423, %v422
    %440 = vmatpush.bf16.msra.mxu0 %v431
    %441 = vmatpush.bf16.msra.mxu0 %v430
    %442 = vmatpush.bf16.msra.mxu0 %v429
    %443 = vmatpush.bf16.msra.mxu0 %v428
    %444 = vmatpush.bf16.msra.mxu0 %v427
    %445 = vmatpush.bf16.msra.mxu0 %v426
    %446 = vmatpush.bf16.msra.mxu0 %v425
    %447 = vmatpush.bf16.msra.mxu0 %v424
    %448 = vmatmul.bf16.gmra.mxu0 %v286
    %v449 = vpop.f32.mrf.mxu0
    %v450 = vadd.f32 %v390, %v449
    %v451 = vpop.f32.mrf.mxu0
    %v452 = vadd.f32 %v390, %v451
    %453 = vdwg.mxu0
    %v454 = vmax.f32 %v450, 0.0
    %v455 = vmax.f32 %v452, 0.0
    %v456 = vpack.c.bf16 %v455, %v454
    %v457 = vld [vmem:[#allocation11] sm:$0xf]
    %v458 = vld [vmem:[#allocation11 + $0x4] sm:$0xf]
    %v459 = vld [vmem:[#allocation11 + $0x8] sm:$0xf]
    %v460 = vld [vmem:[#allocation11 + $0xc] sm:$0xf]
    %v461 = vld [vmem:[#allocation11 + $0x10] sm:$0xf]
    %v462 = vld [vmem:[#allocation11 + $0x14] sm:$0xf]
    %v463 = vld [vmem:[#allocation11 + $0x18] sm:$0xf]
    %v464 = vld [vmem:[#allocation11 + $0x1c] sm:$0xf]
    %v465 = vld [vmem:[#allocation11 + $0x20] sm:$0xf]
    %v466 = vld [vmem:[#allocation11 + $0x24] sm:$0xf]
    %v467 = vld [vmem:[#allocation11 + $0x28] sm:$0xf]
    %v468 = vld [vmem:[#allocation11 + $0x2c] sm:$0xf]
    %v469 = vld [vmem:[#allocation11 + $0x30] sm:$0xf]
    %v470 = vld [vmem:[#allocation11 + $0x34] sm:$0xf]
    %v471 = vld [vmem:[#allocation11 + $0x38] sm:$0xf]
    %v472 = vld [vmem:[#allocation11 + $0x3c] sm:$0xf]
    %v473 = vld [vmem:[#allocation13] sm:$0xf]
    %v474 = vld [vmem:[#allocation13 + $0x4] sm:$0xf]
    %v475 = vld [vmem:[#allocation13 + $0x8] sm:$0xf]
    %v476 = vld [vmem:[#allocation13 + $0xc] sm:$0xf]
    %v477 = vld [vmem:[#allocation13 + $0x10] sm:$0xf]
    %v478 = vld [vmem:[#allocation13 + $0x14] sm:$0xf]
    %v479 = vld [vmem:[#allocation13 + $0x18] sm:$0xf]
    %v480 = vld [vmem:[#allocation13 + $0x1c] sm:$0xf]
    %v481 = vld [vmem:[#allocation13 + $0x20] sm:$0xf]
    %v482 = vld [vmem:[#allocation13 + $0x24] sm:$0xf]
    %v483 = vld [vmem:[#allocation13 + $0x28] sm:$0xf]
    %v484 = vld [vmem:[#allocation13 + $0x2c] sm:$0xf]
    %v485 = vld [vmem:[#allocation13 + $0x30] sm:$0xf]
    %v486 = vld [vmem:[#allocation13 + $0x34] sm:$0xf]
    %v487 = vld [vmem:[#allocation13 + $0x38] sm:$0xf]
    %v488 = vld [vmem:[#allocation13 + $0x3c] sm:$0xf]
    %v505 = vunpack.c.l.b16 %v473
    %v506 = vunpack.c.l.b16 %v474
    %v507 = vunpack.c.l.b16 %v475
    %v508 = vunpack.c.l.b16 %v476
    %v509 = vunpack.c.l.b16 %v477
    %v510 = vunpack.c.l.b16 %v478
    %v511 = vunpack.c.l.b16 %v479
    %v512 = vunpack.c.l.b16 %v480
    %v513 = vunpack.c.l.b16 %v481
    %v514 = vunpack.c.l.b16 %v482
    %v515 = vunpack.c.l.b16 %v483
    %v516 = vunpack.c.l.b16 %v484
    %v517 = vunpack.c.l.b16 %v485
    %v518 = vunpack.c.l.b16 %v486
    %v519 = vunpack.c.l.b16 %v487
    %v520 = vunpack.c.l.b16 %v488
    %v521 = vpack.c.b16 %v506, %v505
    %v522 = vpack.c.b16 %v508, %v507
    %v523 = vpack.c.b16 %v510, %v509
    %v524 = vpack.c.b16 %v512, %v511
    %v525 = vpack.c.b16 %v514, %v513
    %v526 = vpack.c.b16 %v516, %v515
    %v527 = vpack.c.b16 %v518, %v517
    %v528 = vpack.c.b16 %v520, %v519
    %537 = vmatpush.bf16.msra.mxu0 %v528
    %538 = vmatpush.bf16.msra.mxu0 %v527
    %539 = vmatpush.bf16.msra.mxu0 %v526
    %540 = vmatpush.bf16.msra.mxu0 %v525
    %541 = vmatpush.bf16.msra.mxu0 %v524
    %542 = vmatpush.bf16.msra.mxu0 %v523
    %543 = vmatpush.bf16.msra.mxu0 %v522
    %544 = vmatpush.bf16.msra.mxu0 %v521
    %545 = vmatmul.bf16.gmra.mxu0 %v456
    %v546 = vpop.f32.mrf.mxu0
    %v547 = vadd.f32 0.0, %v546
    %v548 = vpop.f32.mrf.mxu0
    %v549 = vadd.f32 0.0, %v548
    %550 = vdwg.mxu0
    %v567 = vunpack.c.l.b16 %v457
    %v568 = vunpack.c.l.b16 %v458
    %v569 = vunpack.c.l.b16 %v459
    %v570 = vunpack.c.l.b16 %v460
    %v571 = vunpack.c.l.b16 %v461
    %v572 = vunpack.c.l.b16 %v462
    %v573 = vunpack.c.l.b16 %v463
    %v574 = vunpack.c.l.b16 %v464
    %v575 = vunpack.c.l.b16 %v465
    %v576 = vunpack.c.l.b16 %v466
    %v577 = vunpack.c.l.b16 %v467
    %v578 = vunpack.c.l.b16 %v468
    %v579 = vunpack.c.l.b16 %v469
    %v580 = vunpack.c.l.b16 %v470
    %v581 = vunpack.c.l.b16 %v471
    %v582 = vunpack.c.l.b16 %v472
    %v583 = vpack.c.b16 %v568, %v567
    %v584 = vpack.c.b16 %v570, %v569
    %v585 = vpack.c.b16 %v572, %v571
    %v586 = vpack.c.b16 %v574, %v573
    %v587 = vpack.c.b16 %v576, %v575
    %v588 = vpack.c.b16 %v578, %v577
    %v589 = vpack.c.b16 %v580, %v579
    %v590 = vpack.c.b16 %v582, %v581
    %599 = vmatpush.bf16.msra.mxu0 %v590
    %600 = vmatpush.bf16.msra.mxu0 %v589
    %601 = vmatpush.bf16.msra.mxu0 %v588
    %602 = vmatpush.bf16.msra.mxu0 %v587
    %603 = vmatpush.bf16.msra.mxu0 %v586
    %604 = vmatpush.bf16.msra.mxu0 %v585
    %605 = vmatpush.bf16.msra.mxu0 %v584
    %606 = vmatpush.bf16.msra.mxu0 %v583
    %607 = vmatmul.bf16.gmra.mxu0 %v371
    %v608 = vpop.f32.mrf.mxu0
    %v609 = vadd.f32 %v547, %v608
    %v610 = vpop.f32.mrf.mxu0
    %v611 = vadd.f32 %v549, %v610
    %612 = vdwg.mxu0
    %v613 = vld [vmem:[%s9] sm:$0x1]
    %v615 = vperm.slane %v613, 0
    %v617 = vadd.f32 %v609, %v615
    %v618 = vadd.f32 %v611, %v615
    %619 = vst [vmem:[#allocation14] sm:$0xff] %v617
    %620 = vst [vmem:[#allocation14 + $0x8] sm:$0xff] %v618
    // Predicated region
    $region70: #{tpu_custom_call.1} parent=1 // pred_check
      _
    $region71: #{tpu_custom_call.1} parent=1 // pred_check_branch
      %622 = sbr.rel (0) target = $region73
    $region72: #{tpu_custom_call.1} parent=1 // pred_region
      %624 = vsyncadd [#allocation4], 0
      %s625 = sshll.u32 [#allocation14], 4
      %s626 = int_to_ptr.vmem [resolvable:$true] %s625
      %s627 = sshll.u32 %s10, 4
      %s628 = int_to_ptr.hbm [resolvable:$true] %s627
      %633 = dma.vmem_to_hbm [thread:$0]  %s626, 256, %s628, [#allocation4], 128, 128, 8
    $region73: #{tpu_custom_call.1} parent=1 // pred_fallthru
      _
    // Predicated region
    $region74: #{tpu_custom_call.1} parent=1 // pred_check
      _
    $region75: #{tpu_custom_call.1} parent=1 // pred_check_branch
      %635 = sbr.rel (0) target = $region77
    $region76: #{tpu_custom_call.1} parent=1 // pred_region
      %637 = dma.done [#allocation4], 256
    $region77: #{tpu_custom_call.1} parent=1 // pred_fallthru
      _
    %638 = vsyncpa [#allocation3], 1
    %639 = vsyncpa [#allocation6], 1
    %640 = vsyncpa [#allocation9], 1
    %641 = vsyncpa [#allocation12], 1
    %642 = vsyncpa [#allocation4], 1

</llo_original>
